<compile_context>
chip_gen: v5e
topology: v5e:2x2
jax: 0.10.0
libtpu: 0.0.40
codegen_flags: <defaults>
</compile_context>

<pallas_src>
import math
from functools import partial

import jax
import jax.numpy as jnp
from jax.experimental import pallas as pl
from jax.experimental.pallas import tpu as pltpu


def _round_up(x, m):
    return (x + m - 1) // m * m


def _nmlp_kernel(x_ref, w_ref, g_ref, b_ref, o_ref, act_ref, *,
                 d_out_pad, use_bf16):
    """One grid step == one MLP block: Linear -> BN(batch stats) -> ReLU.

    x_ref:   [N, D]        padded input (resident, read at layer 0 only)
    w_ref:   [1, D, P]     this layer's (padded) weight, streamed per layer
    g_ref:   [1, 1, P]     gamma
    b_ref:   [1, 1, P]     beta
    o_ref:   [N, P]        final output (written at the last layer only)
    act_ref: [N, D]        VMEM-resident activation carried between layers
    """
    layer = pl.program_id(0)
    last = pl.num_programs(0) - 1
    n_rows, d_in_pad = act_ref.shape

    # Layer 0: seed the resident activation from the (zero-padded) input.
    @pl.when(layer == 0)
    def _():
        act_ref[...] = x_ref[...].astype(jnp.float32)

    a = act_ref[...]
    w = w_ref[0]  # [D, P]
    if use_bf16:
        a = a.astype(jnp.bfloat16)
        w = w.astype(jnp.bfloat16)

    # Linear (bias omitted: cancelled by BN mean subtraction).  MXU, f32 acc.
    y = jnp.dot(a, w, preferred_element_type=jnp.float32)  # [N, P]

    # BatchNorm1d, training mode: batch mean / biased variance, eps=1e-5,
    # with the affine folded into a per-feature scale (computed on [1, P]).
    mean = jnp.mean(y, axis=0, keepdims=True)               # [1, P]
    c = y - mean
    var = jnp.mean(c * c, axis=0, keepdims=True)            # [1, P]
    scale = g_ref[0].astype(jnp.float32) * jax.lax.rsqrt(var + 1e-5)
    beta = b_ref[0].astype(jnp.float32)

    out = jnp.maximum(c * scale + beta, 0.0)                # [N, P]

    # Carry activation to the next layer (skip on the last one).
    @pl.when(layer < last)
    def _():
        if d_in_pad == d_out_pad:
            act_ref[...] = out
        else:
            act_ref[:, :d_out_pad] = out
            act_ref[:, d_out_pad:] = jnp.zeros(
                (n_rows, d_in_pad - d_out_pad), jnp.float32)

    @pl.when(layer == last)
    def _():
        o_ref[...] = out.astype(o_ref.dtype)


@partial(jax.jit, static_argnames=("use_bf16_matmul",))
def nmlp_forward(x, params, use_bf16_matmul=False):
    """Fused NMLP forward.  params: list of (w[d_in,d_out], b[d_out],
    gamma[d_out], beta[d_out]).  The linear bias b is not used by the kernel
    (it is cancelled by training-mode BatchNorm)."""
    n, d_in = x.shape
    n_mlp = len(params)
    d_out = params[0][0].shape[1]

    # Lane-align feature dims to 128.  Batch dim is left alone (BN stats).
    p = _round_up(d_out, 128)            # padded output width
    d = max(_round_up(d_in, 128), p)     # padded input width of every layer

    # Pack / zero-pad the per-layer parameters into stacked tensors.
    dtype = jnp.float32
    w_all = jnp.zeros((n_mlp, d, p), dtype)
    g_all = jnp.zeros((n_mlp, 1, p), dtype)
    b_all = jnp.zeros((n_mlp, 1, p), dtype)
    for l, (w_l, _bias_unused, gamma_l, beta_l) in enumerate(params):
        di, do = w_l.shape
        w_all = w_all.at[l, :di, :do].set(w_l.astype(dtype))
        g_all = g_all.at[l, 0, :do].set(gamma_l.astype(dtype))
        b_all = b_all.at[l, 0, :do].set(beta_l.astype(dtype))

    x_pad = jnp.zeros((n, d), x.dtype).at[:, :d_in].set(x)

    # Advisory cost estimate for the XLA scheduler.
    flops = 2 * n * d * p * n_mlp
    bytes_accessed = 4 * (n * d + n_mlp * d * p + 2 * n_mlp * p + n * p)
    cost = pl.CostEstimate(flops=flops, transcendentals=n_mlp * p,
                           bytes_accessed=bytes_accessed)

    # VMEM budget: resident x + act scratch + double-buffered W / gamma / beta
    # + resident output.  Only raise the scoped limit if we actually need it
    # (keeps headroom on v7x's 64 MiB physical VMEM).
    vmem_est = 4 * (2 * n * d + 2 * d * p + 4 * p + 2 * n * p) + (1 << 20)
    cp_kwargs = dict(dimension_semantics=("arbitrary",))
    if vmem_est > 16 * 1024 * 1024:
        cp_kwargs["vmem_limit_bytes"] = int(min(vmem_est, 100 * 1024 * 1024))

    out_pad = pl.pallas_call(
        partial(_nmlp_kernel, d_out_pad=p, use_bf16=use_bf16_matmul),
        out_shape=jax.ShapeDtypeStruct((n, p), x.dtype),
        grid=(n_mlp,),
        in_specs=[
            pl.BlockSpec((n, d), lambda l: (0, 0)),        # x: resident
            pl.BlockSpec((1, d, p), lambda l: (l, 0, 0)),  # W: per-layer stream
            pl.BlockSpec((1, 1, p), lambda l: (l, 0, 0)),  # gamma
            pl.BlockSpec((1, 1, p), lambda l: (l, 0, 0)),  # beta
        ],
        out_specs=pl.BlockSpec((n, p), lambda l: (0, 0)),  # resident output
        scratch_shapes=[pltpu.VMEM((n, d), jnp.float32)],  # carried activation
        compiler_params=pltpu.CompilerParams(**cp_kwargs),
        cost_estimate=cost,
    )(x_pad, w_all, g_all, b_all)

    return out_pad[:, :d_out]


def init_nmlp_params(key, d_in, d_out, n_mlp=2, dtype=jnp.float32):
    """Deterministic init matching PyTorch defaults:
    Linear: U(-1/sqrt(fan_in), 1/sqrt(fan_in)) for W and b (W pre-transposed
    to [d_in, d_out]).  BatchNorm1d: gamma=1, beta=0."""
    params = []
    dims = [(d_in, d_out)] + [(d_out, d_out)] * (n_mlp - 1)
    for (di, do) in dims:
        key, kw, kb = jax.random.split(key, 3)
        bound = 1.0 / math.sqrt(di)
        w = jax.random.uniform(kw, (di, do), dtype, minval=-bound, maxval=bound)
        b = jax.random.uniform(kb, (do,), dtype, minval=-bound, maxval=bound)
        gamma = jnp.ones((do,), dtype)
        beta = jnp.zeros((do,), dtype)
        params.append((w, b, gamma, beta))
    return params


def nmlp_reference(x, params):
    """Pure-JAX reference matching the PyTorch module exactly (incl. bias)."""
    y = x.astype(jnp.float32)
    for (w, b, gamma, beta) in params:
        y = y @ w.astype(jnp.float32) + b.astype(jnp.float32)
        mean = jnp.mean(y, axis=0, keepdims=True)
        var = jnp.mean((y - mean) ** 2, axis=0, keepdims=True)
        y = (y - mean) * jax.lax.rsqrt(var + 1e-5)
        y = y * gamma.astype(jnp.float32) + beta.astype(jnp.float32)
        y = jnp.maximum(y, 0.0)
    return y.astype(x.dtype)


if __name__ == "__main__":
    key = jax.random.PRNGKey(0)
    kx, kp = jax.random.split(key)

    batch, d_in, d_out, n_mlp = 8, 16, 32, 2
    x = jax.random.normal(kx, (batch, d_in), jnp.float32)
    params = init_nmlp_params(kp, d_in, d_out, n_mlp=n_mlp)

    out = nmlp_forward(x, params)
    out = jax.block_until_ready(out)

    ref = nmlp_reference(x, params)
    assert out.shape == (batch, d_out), out.shape
    assert jnp.allclose(out, ref, atol=1e-4, rtol=1e-4), "mismatch vs reference"

    print("KERNEL_OK")
</pallas_src>

<mosaic_0001>
module attributes {stable_mosaic.version = 11 : i64} {
  func.func @_nmlp_kernel(%arg0: i32, %arg1: memref<8x128xf32, #tpu.memory_space<vmem>>, %arg2: memref<1x128x128xf32, #tpu.memory_space<vmem>>, %arg3: memref<1x1x128xf32, #tpu.memory_space<vmem>>, %arg4: memref<1x1x128xf32, #tpu.memory_space<vmem>>, %arg5: memref<8x128xf32, #tpu.memory_space<vmem>>, %arg6: memref<8x128xf32, #tpu.memory_space<vmem>>) attributes {dimension_semantics = [#tpu.dimension_semantics<arbitrary>], iteration_bounds = array<i64: 2>, scalar_prefetch = 0 : i64, scratch_operands = 1 : i64, tpu.core_type = #tpu.core_type<tc>, window_params = [{pipeline_mode = #tpu.pipeline_mode<synchronous>, transform_indices = @transform_0, window_bounds = array<i64: 8, 128>}, {transform_indices = @transform_1, window_bounds = array<i64: 1, 128, 128>}, {transform_indices = @transform_2, window_bounds = array<i64: 1, 1, 128>}, {transform_indices = @transform_3, window_bounds = array<i64: 1, 1, 128>}, {pipeline_mode = #tpu.pipeline_mode<synchronous>, transform_indices = @transform_4, window_bounds = array<i64: 8, 128>}]} {
    %c0_i32 = arith.constant 0 : i32
    %0 = arith.cmpi eq, %arg0, %c0_i32 : i32
    %1 = arith.extui %0 : i1 to i32
    %c0_i32_0 = arith.constant 0 : i32
    %2 = arith.cmpi ne, %1, %c0_i32_0 : i32
    scf.if %2 {
      %c0_20 = arith.constant 0 : index
      %c0_21 = arith.constant 0 : index
      %38 = vector.load %arg1[%c0_20, %c0_21] : memref<8x128xf32, #tpu.memory_space<vmem>>, vector<8x128xf32>
      %c0_22 = arith.constant 0 : index
      %c0_23 = arith.constant 0 : index
      %39 = vector.load %arg6[%c0_22, %c0_23] : memref<8x128xf32, #tpu.memory_space<vmem>>, vector<8x128xf32>
      tpu.vector_store %arg6[%c0_22, %c0_23], %38 {strides = array<i32>} : memref<8x128xf32, #tpu.memory_space<vmem>>, vector<8x128xf32>,
    } else {
    }
    %c0 = arith.constant 0 : index
    %c0_1 = arith.constant 0 : index
    %3 = vector.load %arg6[%c0, %c0_1] : memref<8x128xf32, #tpu.memory_space<vmem>>, vector<8x128xf32>
    %c0_2 = arith.constant 0 : index
    %c0_3 = arith.constant 0 : index
    %c0_4 = arith.constant 0 : index
    %4 = vector.load %arg2[%c0_2, %c0_3, %c0_4] : memref<1x128x128xf32, #tpu.memory_space<vmem>>, vector<1x128x128xf32>
    %5 = vector.shape_cast %4 : vector<1x128x128xf32> to vector<128x128xf32>
    %cst = arith.constant dense<0.000000e+00> : vector<8x128xf32>
    %6 = tpu.matmul %3, %5, %cst {dimension_numbers = #tpu.dot_dimension_numbers<[1], [0], [0], [1], [0, 0, 1, 1], [], []>} : vector<8x128xf32>, vector<128x128xf32>, vector<8x128xf32> -> vector<8x128xf32>
    %cst_5 = arith.constant dense<0.000000e+00> : vector<128xf32>
    %7 = vector.multi_reduction <add>, %6, %cst_5 [0] : vector<8x128xf32> to vector<128xf32>
    %8 = vector.shape_cast %7 : vector<128xf32> to vector<1x128xf32>
    %cst_6 = arith.constant 8.000000e+00 : f32
    %9 = vector.broadcast %cst_6 : f32 to vector<1x128xf32>
    %10 = arith.divf %8, %9 : vector<1x128xf32>
    %11 = vector.broadcast %10 : vector<1x128xf32> to vector<8x128xf32>
    %12 = arith.subf %6, %11 : vector<8x128xf32>
    %13 = arith.mulf %12, %12 : vector<8x128xf32>
    %cst_7 = arith.constant dense<0.000000e+00> : vector<128xf32>
    %14 = vector.multi_reduction <add>, %13, %cst_7 [0] : vector<8x128xf32> to vector<128xf32>
    %15 = vector.shape_cast %14 : vector<128xf32> to vector<1x128xf32>
    %cst_8 = arith.constant 8.000000e+00 : f32
    %16 = vector.broadcast %cst_8 : f32 to vector<1x128xf32>
    %17 = arith.divf %15, %16 : vector<1x128xf32>
    %c0_9 = arith.constant 0 : index
    %c0_10 = arith.constant 0 : index
    %c0_11 = arith.constant 0 : index
    %18 = vector.load %arg3[%c0_9, %c0_10, %c0_11] : memref<1x1x128xf32, #tpu.memory_space<vmem>>, vector<1x1x128xf32>
    %19 = vector.shape_cast %18 : vector<1x1x128xf32> to vector<1x128xf32>
    %cst_12 = arith.constant 9.99999974E-6 : f32
    %20 = vector.broadcast %cst_12 : f32 to vector<1x128xf32>
    %21 = arith.addf %17, %20 : vector<1x128xf32>
    %22 = math.rsqrt %21 : vector<1x128xf32>
    %23 = arith.mulf %19, %22 : vector<1x128xf32>
    %c0_13 = arith.constant 0 : index
    %c0_14 = arith.constant 0 : index
    %c0_15 = arith.constant 0 : index
    %24 = vector.load %arg4[%c0_13, %c0_14, %c0_15] : memref<1x1x128xf32, #tpu.memory_space<vmem>>, vector<1x1x128xf32>
    %25 = vector.shape_cast %24 : vector<1x1x128xf32> to vector<1x128xf32>
    %26 = vector.broadcast %23 : vector<1x128xf32> to vector<8x128xf32>
    %27 = arith.mulf %12, %26 : vector<8x128xf32>
    %28 = vector.broadcast %25 : vector<1x128xf32> to vector<8x128xf32>
    %29 = arith.addf %27, %28 : vector<8x128xf32>
    %cst_16 = arith.constant 0.000000e+00 : f32
    %30 = vector.broadcast %cst_16 : f32 to vector<8x128xf32>
    %31 = arith.maximumf %29, %30 : vector<8x128xf32>
    %c1_i32 = arith.constant 1 : i32
    %32 = arith.cmpi slt, %arg0, %c1_i32 : i32
    %33 = arith.extui %32 : i1 to i32
    %c0_i32_17 = arith.constant 0 : i32
    %34 = arith.cmpi ne, %33, %c0_i32_17 : i32
    scf.if %34 {
      %c0_20 = arith.constant 0 : index
      %c0_21 = arith.constant 0 : index
      %38 = vector.load %arg6[%c0_20, %c0_21] : memref<8x128xf32, #tpu.memory_space<vmem>>, vector<8x128xf32>
      tpu.vector_store %arg6[%c0_20, %c0_21], %31 {strides = array<i32>} : memref<8x128xf32, #tpu.memory_space<vmem>>, vector<8x128xf32>,
    } else {
    }
    %c1_i32_18 = arith.constant 1 : i32
    %35 = arith.cmpi eq, %arg0, %c1_i32_18 : i32
    %36 = arith.extui %35 : i1 to i32
    %c0_i32_19 = arith.constant 0 : i32
    %37 = arith.cmpi ne, %36, %c0_i32_19 : i32
    scf.if %37 {
      %c0_20 = arith.constant 0 : index
      %c0_21 = arith.constant 0 : index
      %38 = vector.load %arg5[%c0_20, %c0_21] : memref<8x128xf32, #tpu.memory_space<vmem>>, vector<8x128xf32>
      tpu.vector_store %arg5[%c0_20, %c0_21], %31 {strides = array<i32>} : memref<8x128xf32, #tpu.memory_space<vmem>>, vector<8x128xf32>,
    } else {
    }
    return
  }
  func.func @transform_0(%arg0: i32) -> (i32, i32) {
    %c0_i32 = arith.constant 0 : i32
    %c0_i32_0 = arith.constant 0 : i32
    %c0_i32_1 = arith.constant 0 : i32
    return %c0_i32, %c0_i32_0 : i32, i32
  }
  func.func @transform_1(%arg0: i32) -> (i32, i32, i32) {
    %c0_i32 = arith.constant 0 : i32
    %c0_i32_0 = arith.constant 0 : i32
    %c0_i32_1 = arith.constant 0 : i32
    return %arg0, %c0_i32, %c0_i32_0 : i32, i32, i32
  }
  func.func @transform_2(%arg0: i32) -> (i32, i32, i32) {
    %c0_i32 = arith.constant 0 : i32
    %c0_i32_0 = arith.constant 0 : i32
    %c0_i32_1 = arith.constant 0 : i32
    return %arg0, %c0_i32, %c0_i32_0 : i32, i32, i32
  }
  func.func @transform_3(%arg0: i32) -> (i32, i32, i32) {
    %c0_i32 = arith.constant 0 : i32
    %c0_i32_0 = arith.constant 0 : i32
    %c0_i32_1 = arith.constant 0 : i32
    return %arg0, %c0_i32, %c0_i32_0 : i32, i32, i32
  }
  func.func @transform_4(%arg0: i32) -> (i32, i32) {
    %c0_i32 = arith.constant 0 : i32
    %c0_i32_0 = arith.constant 0 : i32
    %c0_i32_1 = arith.constant 0 : i32
    return %c0_i32, %c0_i32_0 : i32, i32
  }
}

</mosaic_0001>

<llo_original>
// kernel: nmlp_forward.1
$region0: #{nmlp_forward.1}
  #allocation0 [shape = 'u32[]', space=smem, size = 0x4, offset = 0x4, fixed_abs, tag = 'smem constant byte address 0x4 - core index']
  #allocation1 [shape = 'u32[72,128]{1,0:T(1,128)}', space=vmem, size = 0x9000, scoped, tag = 'internal scratch']
  #allocation2 [shape = 'f32[8,128]{1,0:T(8,128)}', space=vmem, size = 0x1000, scoped, tag = 'scratch operand']
  %s0 = inlined_call_operand.vmem [shape: f32[8,128], index: 0, kind: input, shape index: {}]
  %s1 = inlined_call_operand.vmem [shape: f32[2,128,128], index: 1, kind: input, shape index: {}]
  %s2 = inlined_call_operand.vmem [shape: f32[2,1,128], index: 2, kind: input, shape index: {}]
  %s3 = inlined_call_operand.vmem [shape: f32[2,1,128], index: 3, kind: input, shape index: {}]
  %s4 = inlined_call_operand.hbm [shape: f32[8,128], index: 4, kind: output, shape index: {}]
  %s5 = sld [smem:[#allocation0]]
  $region61: #{nmlp_forward.1} parent=0
    _
  %s7 = ssub.s32 1, %s5
  %s8 = scalar_select 0, %s7, %s5
  $region1: #{nmlp_forward.1} parent=0
    #allocation3 [shape = 'u8[4096]{0}', space=vmem, size = 0x1000, scoped, tag = 'output window, operand 0, single buffered']
    #allocation4 [shape = 's32[2]{0}', space=sflag, size = 0x8, scoped, tag = 'scoped memory for nmlp_forward.1']
    %9 = vsyncpa [#allocation4], 0
    loop: start=0, step=1, limit=4
    $region2: #{nmlp_forward.1} parent=1 // loop_pre_header
      _
    $region3: #{nmlp_forward.1} parent=1 // loop_header
      %s11 = sphi 0, %s15
      %p12 = scmp.ge.s32.totalorder %s11, 4
      %s19 = sphi 0, %s19
      %s21 = sphi 0, %s19
      %s22 = sphi 0, %s21
      %s36 = sphi 0, %s22
      %s42 = sphi 0, %s44
      %s45 = sphi 0, %s42
      %s46 = sphi 0, %s45
      %s62 = sphi 0, %s46
      %s68 = sphi 0, %s70
      %s71 = sphi 0, %s68
      %s72 = sphi 0, %s71
      %s88 = sphi 0, %s72
      %s94 = sphi 0, %s96
      %s97 = sphi 0, %s94
      %s98 = sphi 0, %s97
      %s114 = sphi 0, %s98
      %s118 = sphi 0, %s118
      %s120 = sphi 0, %s118
      %s121 = sphi 0, %s120
      %s135 = sphi 0, %s121
    $region4: #{nmlp_forward.1} parent=1 // loop_header_branch
      %14 = sbr.rel (%p12) target = $region8
    $region5: #{nmlp_forward.1} parent=1 // loop_body
      %s16 = ssub.s32 %s11, 1
      %s17 = ssub.s32 %s11, 2
      %s18 = sadd.s32 %s11, 1
      %s20 = sadd.s32 %s19, 1
      %p23 = scmp.eq.s32.totalorder %s11, 1
      %p24 = scmp.ne.s32.totalorder %s19, %s21
      %p25 = scmp.eq.s32.totalorder %s11, 0
      %p26 = por %p24, %p25
      %p27 = scmp.ne.s32.totalorder %s19, %s21
      %p28 = scmp.eq.s32.totalorder %s16, 1
      %p29 = por %p27, %p28
      %p30 = scmp.ne.s32.totalorder %s21, %s22
      %p31 = scmp.eq.s32.totalorder %s16, 0
      %p32 = por %p30, %p31
      %p33 = scmp.ne.s32.totalorder %s21, %s22
      %p34 = scmp.eq.s32.totalorder %s17, 1
      %p35 = por %p33, %p34
      %p37 = scmp.ne.s32.totalorder %s22, %s36
      %p38 = scmp.eq.s32.totalorder %s17, 0
      %p39 = por %p37, %p38
      %s40 = ssub.s32 %s11, %s18
      %p41 = scmp.eq.s32.totalorder %s40, 0
      %s43 = sadd.s32 %s42, 1
      %s44 = scalar_select %p41, %s42, %s43
      %p47 = pneg %p41
      %p48 = scmp.eq.s32.totalorder %s11, 1
      %p49 = por %p47, %p48
      %p50 = scmp.ne.s32.totalorder %s42, %s45
      %p51 = scmp.eq.s32.totalorder %s11, 0
      %p52 = por %p50, %p51
      %p53 = scmp.ne.s32.totalorder %s42, %s45
      %p54 = scmp.eq.s32.totalorder %s16, 1
      %p55 = por %p53, %p54
      %p56 = scmp.ne.s32.totalorder %s45, %s46
      %p57 = scmp.eq.s32.totalorder %s16, 0
      %p58 = por %p56, %p57
      %p59 = scmp.ne.s32.totalorder %s45, %s46
      %p60 = scmp.eq.s32.totalorder %s17, 1
      %p61 = por %p59, %p60
      %p63 = scmp.ne.s32.totalorder %s46, %s62
      %p64 = scmp.eq.s32.totalorder %s17, 0
      %p65 = por %p63, %p64
      %s66 = ssub.s32 %s11, %s18
      %p67 = scmp.eq.s32.totalorder %s66, 0
      %s69 = sadd.s32 %s68, 1
      %s70 = scalar_select %p67, %s68, %s69
      %p73 = pneg %p67
      %p74 = scmp.eq.s32.totalorder %s11, 1
      %p75 = por %p73, %p74
      %p76 = scmp.ne.s32.totalorder %s68, %s71
      %p77 = scmp.eq.s32.totalorder %s11, 0
      %p78 = por %p76, %p77
      %p79 = scmp.ne.s32.totalorder %s68, %s71
      %p80 = scmp.eq.s32.totalorder %s16, 1
      %p81 = por %p79, %p80
      %p82 = scmp.ne.s32.totalorder %s71, %s72
      %p83 = scmp.eq.s32.totalorder %s16, 0
      %p84 = por %p82, %p83
      %p85 = scmp.ne.s32.totalorder %s71, %s72
      %p86 = scmp.eq.s32.totalorder %s17, 1
      %p87 = por %p85, %p86
      %p89 = scmp.ne.s32.totalorder %s72, %s88
      %p90 = scmp.eq.s32.totalorder %s17, 0
      %p91 = por %p89, %p90
      %s92 = ssub.s32 %s11, %s18
      %p93 = scmp.eq.s32.totalorder %s92, 0
      %s95 = sadd.s32 %s94, 1
      %s96 = scalar_select %p93, %s94, %s95
      %p99 = pneg %p93
      %p100 = scmp.eq.s32.totalorder %s11, 1
      %p101 = por %p99, %p100
      %p102 = scmp.ne.s32.totalorder %s94, %s97
      %p103 = scmp.eq.s32.totalorder %s11, 0
      %p104 = por %p102, %p103
      %p105 = scmp.ne.s32.totalorder %s94, %s97
      %p106 = scmp.eq.s32.totalorder %s16, 1
      %p107 = por %p105, %p106
      %p108 = scmp.ne.s32.totalorder %s97, %s98
      %p109 = scmp.eq.s32.totalorder %s16, 0
      %p110 = por %p108, %p109
      %p111 = scmp.ne.s32.totalorder %s97, %s98
      %p112 = scmp.eq.s32.totalorder %s17, 1
      %p113 = por %p111, %p112
      %p115 = scmp.ne.s32.totalorder %s98, %s114
      %p116 = scmp.eq.s32.totalorder %s17, 0
      %p117 = por %p115, %p116
      %s119 = sadd.s32 %s118, 1
      %p122 = scmp.eq.s32.totalorder %s11, 1
      %p123 = scmp.ne.s32.totalorder %s118, %s120
      %p124 = scmp.eq.s32.totalorder %s11, 0
      %p125 = por %p123, %p124
      %p126 = scmp.ne.s32.totalorder %s118, %s120
      %p127 = scmp.eq.s32.totalorder %s16, 1
      %p128 = por %p126, %p127
      %p129 = scmp.ne.s32.totalorder %s120, %s121
      %p130 = scmp.eq.s32.totalorder %s16, 0
      %p131 = por %p129, %p130
      %p132 = scmp.ne.s32.totalorder %s120, %s121
      %p133 = scmp.eq.s32.totalorder %s17, 1
      %p134 = por %p132, %p133
      %p136 = scmp.ne.s32.totalorder %s121, %s135
      %p137 = scmp.eq.s32.totalorder %s17, 0
      %p138 = por %p136, %p137
      %p139 = scmp.le.s32.totalorder 1, %s11
      %p140 = scmp.lt.s32.totalorder %s11, 3
      %p141 = pnand %p139, %p140
      %p142 = pneg %p141
      // Predicated region
      $region9: #{nmlp_forward.1} parent=5 // pred_check
        _
      $region10: #{nmlp_forward.1} parent=5 // pred_check_branch
        %144 = sbr.rel (%p141) target = $region12
      $region11: #{nmlp_forward.1} parent=5 // pred_region
        %s145 = ssub.s32 %s11, 1
        // Predicated region
        $region13: #{nmlp_forward.1} parent=11 // pred_check
          %p146 = pneg %p32
        $region14: #{nmlp_forward.1} parent=11 // pred_check_branch
          %148 = sbr.rel (%p146) target = $region16
        $region15: #{nmlp_forward.1} parent=11 // pred_region
          _
        $region16: #{nmlp_forward.1} parent=11 // pred_fallthru
          _
      $region12: #{nmlp_forward.1} parent=5 // pred_fallthru
        _
      %p149 = scmp.lt.s32.totalorder %s11, 2
      // Predicated region
      $region17: #{nmlp_forward.1} parent=5 // pred_check
        %p150 = pneg %p149
      $region18: #{nmlp_forward.1} parent=5 // pred_check_branch
        %152 = sbr.rel (%p150) target = $region20
      $region19: #{nmlp_forward.1} parent=5 // pred_region
        // Predicated region
        $region21: #{nmlp_forward.1} parent=19 // pred_check
          %p153 = pneg %p52
        $region22: #{nmlp_forward.1} parent=19 // pred_check_branch
          %155 = sbr.rel (%p153) target = $region24
        $region23: #{nmlp_forward.1} parent=19 // pred_region
          %p156 = scmp.lt.s32.totalorder %s11, 1
          %s157 = scalar_select %p156, %s11, 1
          %s158 = smul.addr %s157, 16
          %s159 = smul.addr %s158, 8
          %s160 = scalar_lea.vmem %s1, %s159
        $region24: #{nmlp_forward.1} parent=19 // pred_fallthru
          _
        // Predicated region
        $region25: #{nmlp_forward.1} parent=19 // pred_check
          %p161 = pneg %p78
        $region26: #{nmlp_forward.1} parent=19 // pred_check_branch
          %163 = sbr.rel (%p161) target = $region28
        $region27: #{nmlp_forward.1} parent=19 // pred_region
          %p164 = scmp.lt.s32.totalorder %s11, 1
          %s165 = scalar_select %p164, %s11, 1
          %s166 = scalar_lea.vmem %s2, %s165
        $region28: #{nmlp_forward.1} parent=19 // pred_fallthru
          _
        // Predicated region
        $region29: #{nmlp_forward.1} parent=19 // pred_check
          %p167 = pneg %p104
        $region30: #{nmlp_forward.1} parent=19 // pred_check_branch
          %169 = sbr.rel (%p167) target = $region32
        $region31: #{nmlp_forward.1} parent=19 // pred_region
          %p170 = scmp.lt.s32.totalorder %s11, 1
          %s171 = scalar_select %p170, %s11, 1
          %s172 = scalar_lea.vmem %s3, %s171
        $region32: #{nmlp_forward.1} parent=19 // pred_fallthru
          _
      $region20: #{nmlp_forward.1} parent=5 // pred_fallthru
        _
      %p173 = scmp.le.s32.totalorder 1, %s11
      %p174 = scmp.lt.s32.totalorder %s11, 3
      %p175 = pnand %p173, %p174
      %p176 = pneg %p175
      // Predicated region
      $region33: #{nmlp_forward.1} parent=5 // pred_check
        _
      $region34: #{nmlp_forward.1} parent=5 // pred_check_branch
        %178 = sbr.rel (%p175) target = $region36
      $region35: #{nmlp_forward.1} parent=5 // pred_region
        %s179 = ssub.s32 %s11, 1
        %p180 = pneg %p32
        %p181 = pneg %p29
        %p182 = scmp.lt.s32.totalorder %s16, 1
        %s183 = scalar_select %p182, %s16, 1
        %s184 = smul.addr %s183, 16
        %s185 = smul.addr %s184, 8
        %s186 = scalar_lea.vmem %s1, %s185
        %p187 = pneg %p58
        %p188 = pneg %p55
        %p189 = scmp.lt.s32.totalorder %s16, 1
        %s190 = scalar_select %p189, %s16, 1
        %s191 = scalar_lea.vmem %s2, %s190
        %p192 = pneg %p84
        %p193 = pneg %p81
        %p194 = scmp.lt.s32.totalorder %s16, 1
        %s195 = scalar_select %p194, %s16, 1
        %s196 = scalar_lea.vmem %s3, %s195
        %p197 = pneg %p110
        %p198 = pneg %p107
        %p199 = pneg %p131
        %p200 = pneg %p128
        %p201 = scmp.lt.s32.totalorder %s16, 1
        %s202 = scalar_select %p201, %s16, 1
        %s203 = smul.addr %s202, 16
        %s204 = smul.addr %s203, 8
        %s205 = scalar_lea.vmem %s1, %s204
        %p206 = scmp.lt.s32.totalorder %s16, 1
        %s207 = scalar_select %p206, %s16, 1
        %s208 = scalar_lea.vmem %s2, %s207
        %p209 = scmp.lt.s32.totalorder %s16, 1
        %s210 = scalar_select %p209, %s16, 1
        %s211 = scalar_lea.vmem %s3, %s210
        %p212 = scmp.eq.s32.totalorder %s16, 0
        // Predicated region
        $region37: #{nmlp_forward.1} parent=35 // pred_check
          %p213 = pneg %p212
        $region38: #{nmlp_forward.1} parent=35 // pred_check_branch
          %215 = sbr.rel (%p213) target = $region40
        $region39: #{nmlp_forward.1} parent=35 // pred_region
          %v216 = vld [vmem:[%s0] sm:$0xff]
          %217 = vst [vmem:[#allocation2] sm:$0xff] %v216
        $region40: #{nmlp_forward.1} parent=35 // pred_fallthru
          _
        %v218 = vld [vmem:[#allocation2] sm:$0xff]
        %v219 = vld [vmem:[%s205] sm:$0xff]
        %v220 = vld [vmem:[%s205 + $0x8] sm:$0xff]
        %v221 = vld [vmem:[%s205 + $0x10] sm:$0xff]
        %v222 = vld [vmem:[%s205 + $0x18] sm:$0xff]
        %v223 = vld [vmem:[%s205 + $0x20] sm:$0xff]
        %v224 = vld [vmem:[%s205 + $0x28] sm:$0xff]
        %v225 = vld [vmem:[%s205 + $0x30] sm:$0xff]
        %v226 = vld [vmem:[%s205 + $0x38] sm:$0xff]
        %v227 = vld [vmem:[%s205 + $0x40] sm:$0xff]
        %v228 = vld [vmem:[%s205 + $0x48] sm:$0xff]
        %v229 = vld [vmem:[%s205 + $0x50] sm:$0xff]
        %v230 = vld [vmem:[%s205 + $0x58] sm:$0xff]
        %v231 = vld [vmem:[%s205 + $0x60] sm:$0xff]
        %v232 = vld [vmem:[%s205 + $0x68] sm:$0xff]
        %v233 = vld [vmem:[%s205 + $0x70] sm:$0xff]
        %v234 = vld [vmem:[%s205 + $0x78] sm:$0xff]
        %235 = vmatpush.msra.mxu0 %v234
        %236 = vmatpush.msra.mxu0 %v233
        %237 = vmatpush.msra.mxu0 %v232
        %238 = vmatpush.msra.mxu0 %v231
        %239 = vmatpush.msra.mxu0 %v230
        %240 = vmatpush.msra.mxu0 %v229
        %241 = vmatpush.msra.mxu0 %v228
        %242 = vmatpush.msra.mxu0 %v227
        %243 = vmatpush.msra.mxu0 %v226
        %244 = vmatpush.msra.mxu0 %v225
        %245 = vmatpush.msra.mxu0 %v224
        %246 = vmatpush.msra.mxu0 %v223
        %247 = vmatpush.msra.mxu0 %v222
        %248 = vmatpush.msra.mxu0 %v221
        %249 = vmatpush.msra.mxu0 %v220
        %250 = vmatpush.msra.mxu0 %v219
        %251 = vmatmul.f32.gmra.mxu0 %v218
        %v252 = vpop.f32.mrf.mxu0
        %v253 = vadd.f32 0.0, %v252
        %254 = vdwg.mxu0
        %v255 = vrot.slane %v253, 4
        %v256 = vadd.f32 %v253, %v255
        %v257 = vrot.slane %v256, 2
        %v258 = vadd.f32 %v256, %v257
        %v259 = vrot.slane %v258, 1
        %v260 = vadd.f32 %v258, %v259
        %v261 = vrcp.pop 8.0
        %v262 = vmul.f32 8.0, %v261
        %v263 = vsub.f32 1.0, %v262
        %v264 = vmul.f32 %v261, %v263
        %v265 = vadd.f32 %v261, %v264
        %vm266 = vweird.f32 %v261
        %v267 = vsel %vm266, %v261, %v265
        %v268 = vmul.f32 %v260, %v267
        %v269 = vsub.f32 %v253, %v268
        %v270 = vmul.f32 %v269, %v269
        %v271 = vrot.slane %v270, 4
        %v272 = vadd.f32 %v270, %v271
        %v273 = vrot.slane %v272, 2
        %v274 = vadd.f32 %v272, %v273
        %v275 = vrot.slane %v274, 1
        %v276 = vadd.f32 %v274, %v275
        %v277 = vmul.f32 %v276, %v267
        %v278 = vld [vmem:[%s208] sm:$0x1]
        %v279 = vadd.f32 %v277, 1e-05
        %v280 = vrsqrt.pop %v279
        %v281 = vmul.f32 %v280, %v279
        %v282 = vmul.f32 %v281, %v280
        %v283 = vmul.f32 0.5, %v282
        %v284 = vsub.f32 1.5, %v283
        %v285 = vmul.f32 %v280, %v284
        %vm286 = vweird.f32 %v279
        %vm287 = vweird.f32 %v280
        %vm288 = vmor %vm286, %vm287
        %v289 = vsel %vm288, %v280, %v285
        %v290 = vmul.f32 %v278, %v289
        %v291 = vld [vmem:[%s211] sm:$0x1]
        %v293 = vperm.slane %v290, 0
        %v295 = vmul.f32 %v269, %v293
        %v297 = vperm.slane %v291, 0
        %v299 = vadd.f32 %v295, %v297
        %v300 = vmax.f32 %v299, 0.0
        %p301 = scmp.lt.s32.totalorder %s16, 1
        // Predicated region
        $region41: #{nmlp_forward.1} parent=35 // pred_check
          %p302 = pneg %p301
        $region42: #{nmlp_forward.1} parent=35 // pred_check_branch
          %304 = sbr.rel (%p302) target = $region44
        $region43: #{nmlp_forward.1} parent=35 // pred_region
          %305 = vst [vmem:[#allocation2] sm:$0xff] %v300
        $region44: #{nmlp_forward.1} parent=35 // pred_fallthru
          _
        %p306 = scmp.eq.s32.totalorder %s16, 1
        // Predicated region
        $region45: #{nmlp_forward.1} parent=35 // pred_check
          %p307 = pneg %p306
        $region46: #{nmlp_forward.1} parent=35 // pred_check_branch
          %309 = sbr.rel (%p307) target = $region48
        $region47: #{nmlp_forward.1} parent=35 // pred_region
          %310 = vst [vmem:[#allocation3] sm:$0xff] %v300
        $region48: #{nmlp_forward.1} parent=35 // pred_fallthru
          _
        // Predicated region
        $region49: #{nmlp_forward.1} parent=35 // pred_check
          %p311 = pneg %p128
        $region50: #{nmlp_forward.1} parent=35 // pred_check_branch
          %313 = sbr.rel (%p311) target = $region52
        $region51: #{nmlp_forward.1} parent=35 // pred_region
          %315 = vsyncadd [#allocation4], 0
          %s317 = sshll.u32 [#allocation3], 4
          %s318 = int_to_ptr.vmem [resolvable:$true] %s317
          %s319 = sshll.u32 %s4, 4
          %s320 = int_to_ptr.hbm [resolvable:$true] %s319
          %322 = dma.vmem_to_hbm [thread:$0]  %s318, 128, %s320, [#allocation4]
        $region52: #{nmlp_forward.1} parent=35 // pred_fallthru
          _
        // Predicated region
        $region53: #{nmlp_forward.1} parent=35 // pred_check
          %p323 = pneg %p128
        $region54: #{nmlp_forward.1} parent=35 // pred_check_branch
          %325 = sbr.rel (%p323) target = $region56
        $region55: #{nmlp_forward.1} parent=35 // pred_region
          %327 = dma.done [#allocation4], 128
        $region56: #{nmlp_forward.1} parent=35 // pred_fallthru
          _
      $region36: #{nmlp_forward.1} parent=5 // pred_fallthru
        _
      %p328 = scmp.le.s32.totalorder 2, %s11
      // Predicated region
      $region57: #{nmlp_forward.1} parent=5 // pred_check
        %p329 = pneg %p328
      $region58: #{nmlp_forward.1} parent=5 // pred_check_branch
        %331 = sbr.rel (%p329) target = $region60
      $region59: #{nmlp_forward.1} parent=5 // pred_region
        %s332 = ssub.s32 %s11, 2
      $region60: #{nmlp_forward.1} parent=5 // pred_fallthru
        _
    $region6: #{nmlp_forward.1} parent=1 // loop_footer
      %s15 = sadd.s32 1, %s11
    $region7: #{nmlp_forward.1} parent=1 // loop_footer_branch
      %10 = sbr.rel target = $region3
    $region8: #{nmlp_forward.1} parent=1 // loop_exit
      _
    %333 = vsyncpa [#allocation4], 1
    %s334 = scalar_lea.sflag [#allocation4], 1
    %335 = vsyncpa %s334, 1

</llo_original>
